<compile_context>
chip_gen: v7x
topology: tpu7x:2x2x1
jax: 0.10.0
libtpu: 0.0.40
codegen_flags: <defaults>
</compile_context>

<pallas_src>
import jax
import jax.numpy as jnp
import numpy as np
from jax.experimental import pallas as pl
from jax.experimental.pallas import tpu as pltpu


def _mass_identity_kernel(m_ref, o_ref):
    # forward() == self.mass : copy the scalar on the SMEM (scalar) path.
    o_ref[0] = m_ref[0]


# Built once at import time (hoisted out of any hot path) and jit-cached so
# repeated forward() calls never re-trace or re-construct the pallas_call.
_mass_identity_call = jax.jit(
    pl.pallas_call(
        _mass_identity_kernel,
        out_shape=jax.ShapeDtypeStruct((1,), jnp.float32),
        # Whole (1,) array lives in SMEM inside the kernel: no (8,128) vector
        # tiling, no masked partial stores — this is a single scalar.
        in_specs=[pl.BlockSpec(memory_space=pltpu.MemorySpace.SMEM)],
        out_specs=pl.BlockSpec(memory_space=pltpu.MemorySpace.SMEM),
        # Tell XLA's scheduler this call is essentially free (4 B in, 4 B out)
        # so it is not treated as an opaque barrier between neighboring ops.
        cost_estimate=pl.CostEstimate(flops=0, transcendentals=0,
                                      bytes_accessed=8),
    )
)


def unconstrained_mass_forward(mass: jax.Array, *, use_kernel: bool = False) -> jax.Array:
    """Pallas/JAX implementation of UnconstrainedMassValue.forward().

    `mass` is the (1,)-shaped parameter; forward() returns it unchanged.

    Default (production) path: return the parameter directly — an identity is
    a genuine no-op under jit, which beats any kernel launch on every TPU
    generation.  The `use_kernel=True` path routes the scalar through the
    minimal Pallas identity kernel defined above (exercise requirement).
    """
    assert mass.ndim == 1 and mass.shape[0] == 1, mass.shape
    if not use_kernel:
        return mass
    return _mass_identity_call(mass.astype(jnp.float32)).astype(mass.dtype)


def make_unconstrained_mass_param(init_val=None, key=None,
                                  dtype=jnp.float32) -> jax.Array:
    """Re-implementation of UnconstrainedMassValue.__init__ parameter init."""
    if init_val is not None:
        # torch: self.mass = nn.Parameter(init_val)
        return jnp.asarray(init_val, dtype=dtype).reshape(-1)
    if key is None:
        key = jax.random.PRNGKey(0)
    # torch.rand(1): uniform on [0, 1), shape (1,)
    return jax.random.uniform(key, (1,), dtype=dtype)


if __name__ == "__main__":
    # Default-constructed module: mass = torch.rand(1)  ->  shape (1,), f32.
    key = jax.random.PRNGKey(0)
    mass = make_unconstrained_mass_param(key=key)
    expected = np.asarray(jax.device_get(mass))

    # 1) Production path: identity, no kernel.
    out_fast = jax.block_until_ready(unconstrained_mass_forward(mass))

    # 2) Exercise path: Pallas SMEM identity kernel (no aliasing, zero-cost
    #    annotated, pallas_call hoisted + jit-cached).
    out_kernel = jax.block_until_ready(
        unconstrained_mass_forward(mass, use_kernel=True))
    # Run a second time to confirm the parameter buffer survives (no donation)
    # and the cached call is reusable.
    out_kernel2 = jax.block_until_ready(
        unconstrained_mass_forward(mass, use_kernel=True))

    for out in (out_fast, out_kernel, out_kernel2):
        assert out.shape == (1,), out.shape
        assert out.dtype == mass.dtype, out.dtype
        assert np.allclose(np.asarray(jax.device_get(out)), expected), \
            "forward() must return the mass parameter unchanged"
    # The original parameter buffer must still hold its value (not consumed).
    assert np.allclose(np.asarray(jax.device_get(mass)), expected)

    print("KERNEL_OK")
</pallas_src>

<mosaic_0001>
module attributes {stable_mosaic.version = 11 : i64} {
  func.func @_mass_identity_kernel(%arg0: memref<1xf32, #tpu.memory_space<smem>>, %arg1: memref<1xf32, #tpu.memory_space<smem>>) attributes {dimension_semantics = [], scalar_prefetch = 0 : i64, scratch_operands = 0 : i64, tpu.core_type = #tpu.core_type<tc>} {
    %c0 = arith.constant 0 : index
    %0 = memref.load %arg0[%c0] : memref<1xf32, #tpu.memory_space<smem>>
    %c0_0 = arith.constant 0 : index
    %1 = memref.load %arg1[%c0_0] : memref<1xf32, #tpu.memory_space<smem>>
    memref.store %0, %arg1[%c0_0] : memref<1xf32, #tpu.memory_space<smem>>
    return
  }
}

</mosaic_0001>

<llo_original>
// kernel: tpu_custom_call.1
$region0: #{tpu_custom_call.1}
  #allocation0 [shape = 'u32[]', space=smem, size = 0x4, offset = 0x4, fixed_abs, tag = 'smem constant byte address 0x4 - core index']
  #allocation1 [shape = 'u32[144,128]{1,0:T(1,128)}', space=vmem, size = 0x12000, scoped, tag = 'internal scratch']
  #allocation2 [shape = 'f32[1]{0:T(128)S(6)}', space=smem, size = 0x200, scoped, tag = 'scoped memory for tpu_custom_call.1']
  %s0 = inlined_call_operand.<no memory space> [shape: f32[1], index: 0, kind: input, shape index: {}]
  %s1 = inlined_call_operand.hbm [shape: f32[1], index: 1, kind: output, shape index: {}]
  %s2 = sld [smem:[#allocation0]]
  $region14: #{tpu_custom_call.1} parent=0
    _
  %s4 = ssub.s32 1, %s2
  %s5 = scalar_select 0, %s4, %s2
  %6 = sst [smem:[#allocation2]] %s0
  $region1: #{tpu_custom_call.1} parent=0
    #allocation3 [shape = 'u8[512]{0}', space=smem, size = 0x200, scoped, tag = 'output window, operand 0, single buffered']
    #allocation4 [shape = 's32[1]{0}', space=sflag, size = 0x4, scoped, tag = 'scoped memory for tpu_custom_call.1']
    %7 = vsyncpa [#allocation4], 0
    // Predicated region
    $region2: #{tpu_custom_call.1} parent=1 // pred_check
      _
    $region3: #{tpu_custom_call.1} parent=1 // pred_check_branch
      %9 = sbr.rel (0) target = $region5
    $region4: #{tpu_custom_call.1} parent=1 // pred_region
      _
    $region5: #{tpu_custom_call.1} parent=1 // pred_fallthru
      _
    %s10 = sld [smem:[#allocation2]]
    %s11 = scalar_lea.smem [#allocation3], 0
    %12 = sst [smem:[%s11]] %s10
    // Predicated region
    $region6: #{tpu_custom_call.1} parent=1 // pred_check
      _
    $region7: #{tpu_custom_call.1} parent=1 // pred_check_branch
      %14 = sbr.rel (0) target = $region9
    $region8: #{tpu_custom_call.1} parent=1 // pred_region
      %s16 = ssub.s32 16, 16
      %17 = vsyncadd [#allocation4], %s16
      %20 = dma.smem_to_hbm [#allocation3], 16, %s1, [#allocation4]
    $region9: #{tpu_custom_call.1} parent=1 // pred_fallthru
      _
    // Predicated region
    $region10: #{tpu_custom_call.1} parent=1 // pred_check
      _
    $region11: #{tpu_custom_call.1} parent=1 // pred_check_branch
      %22 = sbr.rel (0) target = $region13
    $region12: #{tpu_custom_call.1} parent=1 // pred_region
      %23 = dma.done [#allocation4], 16
    $region13: #{tpu_custom_call.1} parent=1 // pred_fallthru
      _
    %24 = sfence
    %25 = vsyncpa [#allocation4], 1

</llo_original>
